<compile_context>
chip_gen: v7x
topology: tpu7x:2x2x1
jax: 0.10.0
libtpu: 0.0.40
codegen_flags: <defaults>
</compile_context>

<pallas_src>
import math

import jax
import jax.numpy as jnp
from jax.experimental import pallas as pl
from jax.experimental.pallas import tpu as pltpu

_EXP_NEG_14 = math.exp(-14.0)


def _round_up(n, m):
    return ((n + m - 1) // m) * m


def categorical_kernel(x_ref, w_ref, b_ref, mask_ref, probs_ref, bx_ref, dx_ref):
    # Lane-dense orientation: batch on the last (lane) axis.
    x = x_ref[...]                                   # (K, TN)  bf16
    w = w_ref[...]                                   # (O, K)   bf16 (VMEM-resident)
    b = b_ref[...]                                   # (O, 1)   f32  (VMEM-resident)
    # int8 {0,1} mask -> f32 once, then a single compare drives every select.
    valid = mask_ref[...].astype(jnp.float32) > 0.0  # (O, TN) bool

    # Linear layer on the MXU (tiny vs. DMA traffic), f32 accumulation.
    logits = jnp.dot(w, x, preferred_element_type=jnp.float32) + b   # (O, TN)

    # ---- single shared exp pass, reused by all three heads -----------------
    shifted = logits - jnp.max(logits, axis=0, keepdims=True)        # (O, TN)
    e = jnp.exp(shifted)                                             # (O, TN)
    sum_e = jnp.sum(e, axis=0, keepdims=True)                        # (1, TN)

    e_m = jnp.where(valid, e, 0.0)   # mask * e        (reused by probs & dx)
    e_u = e - e_m                    # (1 - mask) * e  (reused by probs & bx)

    # bx = softmax(logits) * (1 - mask)
    bx_ref[...] = (e_u * pl.reciprocal(sum_e, approx=True)).astype(bx_ref.dtype)

    # probs = renormalized( softmax(logits - 14*(1-mask)) + 1e-5 )
    # exp(logits - 14*(1-mask) - max) == e_m + exp(-14) * e_u   (binary mask)
    e_lx = e_m + _EXP_NEG_14 * e_u
    lx = e_lx * pl.reciprocal(jnp.sum(e_lx, axis=0, keepdims=True), approx=True)
    lx = lx + 1e-5
    probs_ref[...] = (lx * pl.reciprocal(jnp.sum(lx, axis=0, keepdims=True),
                                         approx=True)).astype(probs_ref.dtype)

    # dx = -(p * log p) * mask,  p = mask_softmax(logits, mask) + 1e-12
    # The +/-10000 shift of the reference cancels inside the ratio, so the
    # masked softmax is just e_m / sum(e_m); log_p is computed analytically.
    m_sum = jnp.sum(e_m, axis=0, keepdims=True)                      # (1, TN)
    p = e_m * pl.reciprocal(m_sum, approx=True) + 1e-12
    log_p = shifted - jnp.log(m_sum)     # exact where mask == 1 (only place used)
    dx_ref[...] = jnp.where(valid, -(p * log_p), 0.0).astype(dx_ref.dtype)
    # NOTE: columns whose mask is all zeros yield 0 here (the PyTorch reference
    # yields NaN); the RL environment guarantees >= 1 valid action per row.


def _vmem_limit_bytes(k, o, tn):
    """Scoped-VMEM budget derived from the actual per-tile footprint."""
    dbl = 2                                               # double-buffered pipeline
    in_bytes = dbl * (k * tn * 2 + o * tn * 1)            # x bf16, mask int8
    out_bytes = dbl * (o * tn * (4 + 2 + 2))              # probs f32, bx/dx bf16
    resident = dbl * (o * k * 2 + o * 4)                  # W bf16, b f32
    temps = 8 * o * tn * 4                                # elementwise f32 intermediates
    est = in_bytes + out_bytes + resident + temps
    return max(4 * 1024 * 1024, min(int(est * 1.5), 100 * 1024 * 1024))


def categorical_forward_t(x_t, w, b_col, mask_t, *, block_b=8192):
    """Transposed, lane-dense entry point (the fast path).

    x_t: (K, B), w: (O, K)  [nn.Linear layout], b_col: (O, 1), mask_t: (O, B)
    with a binary {0,1} mask.  Returns (probs_t, bx_t, dx_t): (O, B) each,
    probs_t float32, bx_t / dx_t bfloat16.

    No padding / slicing is done here: the grid uses pl.cdiv and the ragged
    last batch tile is handled by Pallas' boundary read-pad / write-mask.
    """
    K, B = x_t.shape
    O = w.shape[0]

    # Lane tile over the batch: multiple of 128; 8192 default amortizes the
    # ~0.35us/step grid overhead (raise to 16384 on v7x if VMEM allows).
    tn = min(block_b, _round_up(B, 128))
    grid = (pl.cdiv(B, tn),)

    out_shapes = (
        jax.ShapeDtypeStruct((O, B), jnp.float32),    # probs (distribution)
        jax.ShapeDtypeStruct((O, B), jnp.bfloat16),   # bx
        jax.ShapeDtypeStruct((O, B), jnp.bfloat16),   # dx
    )
    out_spec = pl.BlockSpec((O, tn), lambda i: (0, i))

    probs_t, bx_t, dx_t = pl.pallas_call(
        categorical_kernel,
        out_shape=out_shapes,
        grid_spec=pltpu.PrefetchScalarGridSpec(
            num_scalar_prefetch=0,
            grid=grid,
            in_specs=[
                pl.BlockSpec((K, tn), lambda i: (0, i)),     # x tile
                pl.BlockSpec((O, K), lambda i: (0, 0)),      # W: resident
                pl.BlockSpec((O, 1), lambda i: (0, 0)),      # b: resident
                pl.BlockSpec((O, tn), lambda i: (0, i)),     # mask tile (int8)
            ],
            out_specs=(out_spec, out_spec, out_spec),
        ),
        compiler_params=pltpu.CompilerParams(
            dimension_semantics=("parallel",),
            vmem_limit_bytes=_vmem_limit_bytes(K, O, tn),
        ),
    )(x_t.astype(jnp.bfloat16), w.astype(jnp.bfloat16),
      b_col.astype(jnp.float32), mask_t.astype(jnp.int8))

    return probs_t, bx_t, dx_t


def categorical_forward(x, w, b, mask, *, block_b=8192):
    """Standard-layout entry matching the PyTorch module.

    x: (B, num_inputs), w: (num_outputs, num_inputs), b: (num_outputs,),
    mask: (B, num_outputs).  Returns (probs, bx, dx), each (B, num_outputs);
    probs f32, bx/dx bf16.

    The transposes here are layout plumbing (they re-read/re-write everything
    in HBM); fused producers/consumers should call `categorical_forward_t`
    directly so the batch stays on the lane axis end-to-end.
    """
    num_outputs = w.shape[0]
    probs_t, bx_t, dx_t = categorical_forward_t(
        jnp.transpose(x), w, b.reshape(num_outputs, 1), jnp.transpose(mask),
        block_b=block_b)
    return jnp.transpose(probs_t), jnp.transpose(bx_t), jnp.transpose(dx_t)


def make_params(key, num_inputs, num_outputs, gain=0.01):
    """Orthogonal init (gain=0.01) -> W of shape (num_outputs, num_inputs), zero bias."""
    a = jax.random.normal(key, (max(num_inputs, num_outputs),
                                min(num_inputs, num_outputs)), dtype=jnp.float32)
    q, r = jnp.linalg.qr(a)
    q = q * jnp.sign(jnp.diag(r))
    if num_outputs >= num_inputs:
        w = q[:num_outputs, :num_inputs]
    else:
        w = q[:num_inputs, :num_outputs].T
    return gain * w, jnp.zeros((num_outputs,), dtype=jnp.float32)


def reference_forward(x, w, b, mask):
    """Pure-JAX reference mirroring the PyTorch module (same bf16 matmul cast)."""
    logits = jnp.dot(x.astype(jnp.bfloat16), w.T.astype(jnp.bfloat16),
                     preferred_element_type=jnp.float32) + b[None, :]
    inver = 1.0 - mask
    lx = jax.nn.softmax(logits - inver * 14.0, axis=-1) + 1e-5
    probs = lx / jnp.sum(lx, axis=-1, keepdims=True)
    bx = jax.nn.softmax(logits, axis=-1) * inver
    m = logits + mask * 10000.0
    m_max = jnp.max(m, axis=-1, keepdims=True)
    m_exp = jnp.exp(m - m_max) * mask
    m_sum = jnp.sum(m_exp, axis=-1, keepdims=True)
    p = m_exp / m_sum + 1e-12
    dx = -(p * jnp.log(p)) * mask
    return probs, bx, dx


if __name__ == "__main__":
    B, num_inputs, num_outputs = 8, 32, 16

    key = jax.random.PRNGKey(0)
    k_x, k_w, k_m = jax.random.split(key, 3)

    x = jax.random.normal(k_x, (B, num_inputs), dtype=jnp.float32)
    mask = jax.random.bernoulli(k_m, 0.5, (B, num_outputs)).astype(jnp.float32)
    # env guarantees at least one valid action per row
    mask = mask.at[:, 0].set(1.0)

    w, b = make_params(k_w, num_inputs, num_outputs, gain=0.01)

    # Fast path: lane-dense layout end-to-end (transposes below are test-only).
    fwd_t = jax.jit(categorical_forward_t)
    probs_t, bx_t, dx_t = fwd_t(x.T, w, b.reshape(num_outputs, 1), mask.T)
    jax.block_until_ready((probs_t, bx_t, dx_t))

    probs = jnp.transpose(probs_t)
    bx = jnp.transpose(bx_t).astype(jnp.float32)
    dx = jnp.transpose(dx_t).astype(jnp.float32)

    probs_r, bx_r, dx_r = reference_forward(x, w, b, mask)

    assert probs.shape == (B, num_outputs)
    assert bx.shape == (B, num_outputs)
    assert dx.shape == (B, num_outputs)
    assert bool(jnp.all(jnp.isfinite(probs)))
    assert bool(jnp.all(jnp.isfinite(bx)))
    assert bool(jnp.all(jnp.isfinite(dx)))
    # probs rows sum to 1 (f32 output + approx-reciprocal renormalization)
    assert bool(jnp.allclose(jnp.sum(probs, axis=-1), 1.0, atol=5e-3))
    # match the pure-JAX reference (tolerances cover approx vrcp, the exact
    # masked-softmax rewrite vs. the +/-10000 trick, and bf16 bx/dx outputs)
    assert bool(jnp.allclose(probs, probs_r, rtol=2e-2, atol=1e-3))
    assert bool(jnp.allclose(bx, bx_r, rtol=2e-2, atol=4e-3))
    assert bool(jnp.allclose(dx, dx_r, rtol=2e-2, atol=4e-3))

    print("KERNEL_OK")
</pallas_src>

<mosaic_0001>
module attributes {stable_mosaic.version = 11 : i64} {
  func.func @categorical_kernel(%arg0: i32, %arg1: memref<32x128xbf16, #tpu.memory_space<vmem>>, %arg2: memref<16x32xbf16, #tpu.memory_space<vmem>>, %arg3: memref<16x1xf32, #tpu.memory_space<vmem>>, %arg4: memref<16x128xi8, #tpu.memory_space<vmem>>, %arg5: memref<16x128xf32, #tpu.memory_space<vmem>>, %arg6: memref<16x128xbf16, #tpu.memory_space<vmem>>, %arg7: memref<16x128xbf16, #tpu.memory_space<vmem>>) attributes {dimension_semantics = [#tpu.dimension_semantics<parallel>], iteration_bounds = array<i64: 1>, scalar_prefetch = 0 : i64, scratch_operands = 0 : i64, tpu.core_type = #tpu.core_type<tc>, window_params = [{transform_indices = @transform_0, window_bounds = array<i64: 32, 128>}, {pipeline_mode = #tpu.pipeline_mode<synchronous>, transform_indices = @transform_1, window_bounds = array<i64: 16, 32>}, {pipeline_mode = #tpu.pipeline_mode<synchronous>, transform_indices = @transform_2, window_bounds = array<i64: 16, 1>}, {transform_indices = @transform_3, window_bounds = array<i64: 16, 128>}, {transform_indices = @transform_4, window_bounds = array<i64: 16, 128>}, {transform_indices = @transform_5, window_bounds = array<i64: 16, 128>}, {transform_indices = @transform_6, window_bounds = array<i64: 16, 128>}]} {
    %c0 = arith.constant 0 : index
    %c0_0 = arith.constant 0 : index
    %0 = vector.load %arg1[%c0, %c0_0] : memref<32x128xbf16, #tpu.memory_space<vmem>>, vector<32x128xbf16>
    %c0_1 = arith.constant 0 : index
    %c0_2 = arith.constant 0 : index
    %1 = vector.load %arg2[%c0_1, %c0_2] : memref<16x32xbf16, #tpu.memory_space<vmem>>, vector<16x32xbf16>
    %c0_3 = arith.constant 0 : index
    %c0_4 = arith.constant 0 : index
    %2 = vector.load %arg3[%c0_3, %c0_4] : memref<16x1xf32, #tpu.memory_space<vmem>>, vector<16x1xf32>
    %c0_5 = arith.constant 0 : index
    %c0_6 = arith.constant 0 : index
    %3 = vector.load %arg4[%c0_5, %c0_6] : memref<16x128xi8, #tpu.memory_space<vmem>>, vector<16x128xi8>
    %4 = arith.sitofp %3 : vector<16x128xi8> to vector<16x128xf32>
    %cst = arith.constant 0.000000e+00 : f32
    %5 = vector.broadcast %cst : f32 to vector<16x128xf32>
    %6 = arith.cmpf ogt, %4, %5 : vector<16x128xf32>
    %cst_7 = arith.constant dense<0.000000e+00> : vector<16x128xf32>
    %7 = tpu.matmul %1, %0, %cst_7 {dimension_numbers = #tpu.dot_dimension_numbers<[1], [0], [0], [1], [0, 0, 1, 1], [], []>} : vector<16x32xbf16>, vector<32x128xbf16>, vector<16x128xf32> -> vector<16x128xf32>
    %8 = vector.broadcast %2 : vector<16x1xf32> to vector<16x128xf32>
    %9 = arith.addf %7, %8 : vector<16x128xf32>
    %cst_8 = arith.constant dense<0xFF800000> : vector<128xf32>
    %10 = vector.multi_reduction <maximumf>, %9, %cst_8 [0] : vector<16x128xf32> to vector<128xf32>
    %11 = vector.shape_cast %10 : vector<128xf32> to vector<1x128xf32>
    %12 = vector.broadcast %11 : vector<1x128xf32> to vector<16x128xf32>
    %13 = arith.subf %9, %12 : vector<16x128xf32>
    %14 = math.exp %13 : vector<16x128xf32>
    %cst_9 = arith.constant dense<0.000000e+00> : vector<128xf32>
    %15 = vector.multi_reduction <add>, %14, %cst_9 [0] : vector<16x128xf32> to vector<128xf32>
    %16 = vector.shape_cast %15 : vector<128xf32> to vector<1x128xf32>
    %cst_10 = arith.constant 0.000000e+00 : f32
    %17 = vector.broadcast %cst_10 : f32 to vector<16x128xf32>
    %18 = arith.select %6, %14, %17 : vector<16x128xi1>, vector<16x128xf32>
    %19 = arith.subf %14, %18 : vector<16x128xf32>
    %20 = tpu.reciprocal %16 {approx = true} : vector<1x128xf32> -> vector<1x128xf32>
    %21 = vector.broadcast %20 : vector<1x128xf32> to vector<16x128xf32>
    %22 = arith.mulf %19, %21 : vector<16x128xf32>
    %23 = arith.truncf %22 : vector<16x128xf32> to vector<16x128xbf16>
    %c0_11 = arith.constant 0 : index
    %c0_12 = arith.constant 0 : index
    %24 = vector.load %arg6[%c0_11, %c0_12] : memref<16x128xbf16, #tpu.memory_space<vmem>>, vector<16x128xbf16>
    tpu.vector_store %arg6[%c0_11, %c0_12], %23 {strides = array<i32>} : memref<16x128xbf16, #tpu.memory_space<vmem>>, vector<16x128xbf16>,
    %cst_13 = arith.constant 8.31528723E-7 : f32
    %25 = vector.broadcast %cst_13 : f32 to vector<16x128xf32>
    %26 = arith.mulf %25, %19 : vector<16x128xf32>
    %27 = arith.addf %18, %26 : vector<16x128xf32>
    %cst_14 = arith.constant dense<0.000000e+00> : vector<128xf32>
    %28 = vector.multi_reduction <add>, %27, %cst_14 [0] : vector<16x128xf32> to vector<128xf32>
    %29 = vector.shape_cast %28 : vector<128xf32> to vector<1x128xf32>
    %30 = tpu.reciprocal %29 {approx = true} : vector<1x128xf32> -> vector<1x128xf32>
    %31 = vector.broadcast %30 : vector<1x128xf32> to vector<16x128xf32>
    %32 = arith.mulf %27, %31 : vector<16x128xf32>
    %cst_15 = arith.constant 9.99999974E-6 : f32
    %33 = vector.broadcast %cst_15 : f32 to vector<16x128xf32>
    %34 = arith.addf %32, %33 : vector<16x128xf32>
    %cst_16 = arith.constant dense<0.000000e+00> : vector<128xf32>
    %35 = vector.multi_reduction <add>, %34, %cst_16 [0] : vector<16x128xf32> to vector<128xf32>
    %36 = vector.shape_cast %35 : vector<128xf32> to vector<1x128xf32>
    %37 = tpu.reciprocal %36 {approx = true} : vector<1x128xf32> -> vector<1x128xf32>
    %38 = vector.broadcast %37 : vector<1x128xf32> to vector<16x128xf32>
    %39 = arith.mulf %34, %38 : vector<16x128xf32>
    %c0_17 = arith.constant 0 : index
    %c0_18 = arith.constant 0 : index
    %40 = vector.load %arg5[%c0_17, %c0_18] : memref<16x128xf32, #tpu.memory_space<vmem>>, vector<16x128xf32>
    tpu.vector_store %arg5[%c0_17, %c0_18], %39 {strides = array<i32>} : memref<16x128xf32, #tpu.memory_space<vmem>>, vector<16x128xf32>,
    %cst_19 = arith.constant dense<0.000000e+00> : vector<128xf32>
    %41 = vector.multi_reduction <add>, %18, %cst_19 [0] : vector<16x128xf32> to vector<128xf32>
    %42 = vector.shape_cast %41 : vector<128xf32> to vector<1x128xf32>
    %43 = tpu.reciprocal %42 {approx = true} : vector<1x128xf32> -> vector<1x128xf32>
    %44 = vector.broadcast %43 : vector<1x128xf32> to vector<16x128xf32>
    %45 = arith.mulf %18, %44 : vector<16x128xf32>
    %cst_20 = arith.constant 9.99999996E-13 : f32
    %46 = vector.broadcast %cst_20 : f32 to vector<16x128xf32>
    %47 = arith.addf %45, %46 : vector<16x128xf32>
    %48 = math.log %42 : vector<1x128xf32>
    %49 = vector.broadcast %48 : vector<1x128xf32> to vector<16x128xf32>
    %50 = arith.subf %13, %49 : vector<16x128xf32>
    %51 = arith.mulf %47, %50 : vector<16x128xf32>
    %cst_21 = arith.constant 0.000000e+00 : f32
    %52 = vector.broadcast %cst_21 : f32 to vector<16x128xf32>
    %53 = arith.subf %52, %51 : vector<16x128xf32>
    %cst_22 = arith.constant 0.000000e+00 : f32
    %54 = vector.broadcast %cst_22 : f32 to vector<16x128xf32>
    %55 = arith.select %6, %53, %54 : vector<16x128xi1>, vector<16x128xf32>
    %56 = arith.truncf %55 : vector<16x128xf32> to vector<16x128xbf16>
    %c0_23 = arith.constant 0 : index
    %c0_24 = arith.constant 0 : index
    %57 = vector.load %arg7[%c0_23, %c0_24] : memref<16x128xbf16, #tpu.memory_space<vmem>>, vector<16x128xbf16>
    tpu.vector_store %arg7[%c0_23, %c0_24], %56 {strides = array<i32>} : memref<16x128xbf16, #tpu.memory_space<vmem>>, vector<16x128xbf16>,
    return
  }
  func.func @transform_0(%arg0: i32) -> (i32, i32) {
    %c0_i32 = arith.constant 0 : i32
    %c0_i32_0 = arith.constant 0 : i32
    return %c0_i32, %arg0 : i32, i32
  }
  func.func @transform_1(%arg0: i32) -> (i32, i32) {
    %c0_i32 = arith.constant 0 : i32
    %c0_i32_0 = arith.constant 0 : i32
    %c0_i32_1 = arith.constant 0 : i32
    return %c0_i32, %c0_i32_0 : i32, i32
  }
  func.func @transform_2(%arg0: i32) -> (i32, i32) {
    %c0_i32 = arith.constant 0 : i32
    %c0_i32_0 = arith.constant 0 : i32
    %c0_i32_1 = arith.constant 0 : i32
    return %c0_i32, %c0_i32_0 : i32, i32
  }
  func.func @transform_3(%arg0: i32) -> (i32, i32) {
    %c0_i32 = arith.constant 0 : i32
    %c0_i32_0 = arith.constant 0 : i32
    return %c0_i32, %arg0 : i32, i32
  }
  func.func @transform_4(%arg0: i32) -> (i32, i32) {
    %c0_i32 = arith.constant 0 : i32
    %c0_i32_0 = arith.constant 0 : i32
    return %c0_i32, %arg0 : i32, i32
  }
  func.func @transform_5(%arg0: i32) -> (i32, i32) {
    %c0_i32 = arith.constant 0 : i32
    %c0_i32_0 = arith.constant 0 : i32
    return %c0_i32, %arg0 : i32, i32
  }
  func.func @transform_6(%arg0: i32) -> (i32, i32) {
    %c0_i32 = arith.constant 0 : i32
    %c0_i32_0 = arith.constant 0 : i32
    return %c0_i32, %arg0 : i32, i32
  }
}

</mosaic_0001>

<llo_original>
// kernel: categorical_forward_t.1
$region0: #{categorical_forward_t.1}
  #allocation0 [shape = 'u32[]', space=smem, size = 0x4, offset = 0x4, fixed_abs, tag = 'smem constant byte address 0x4 - core index']
  #allocation1 [shape = 'u32[144,128]{1,0:T(1,128)}', space=vmem, size = 0x12000, scoped, tag = 'internal scratch']
  %s0 = inlined_call_operand.vmem [shape: bf16[32,8], index: 0, kind: input, shape index: {}]
  %s1 = inlined_call_operand.vmem [shape: bf16[16,32], index: 1, kind: input, shape index: {}]
  %s2 = inlined_call_operand.vmem [shape: f32[16,1], index: 2, kind: input, shape index: {}]
  %s3 = inlined_call_operand.vmem [shape: s8[16,8], index: 3, kind: input, shape index: {}]
  %s4 = inlined_call_operand.vmem [shape: f32[16,8], index: 4, kind: output, shape index: {0}]
  %s5 = inlined_call_operand.vmem [shape: bf16[16,8], index: 5, kind: output, shape index: {1}]
  %s6 = inlined_call_operand.vmem [shape: bf16[16,8], index: 6, kind: output, shape index: {2}]
  %7 = xla_tuple %s4, %s5, %s6
  %s8 = sld [smem:[#allocation0]]
  $region42: #{categorical_forward_t.1} parent=0
    _
  %s10 = ssub.s32 1, %s8
  %s11 = scalar_select 0, %s10, %s8
  // Predicated region
  $region2: #{categorical_forward_t.1} parent=0 // pred_check
    _
  $region3: #{categorical_forward_t.1} parent=0 // pred_check_branch
    %13 = sbr.rel (0) target = $region5
  $region4: #{categorical_forward_t.1} parent=0 // pred_region
    _
  $region5: #{categorical_forward_t.1} parent=0 // pred_fallthru
    _
  // Predicated region
  $region6: #{categorical_forward_t.1} parent=0 // pred_check
    _
  $region7: #{categorical_forward_t.1} parent=0 // pred_check_branch
    %15 = sbr.rel (0) target = $region9
  $region8: #{categorical_forward_t.1} parent=0 // pred_region
    _
  $region9: #{categorical_forward_t.1} parent=0 // pred_fallthru
    _
  // Predicated region
  $region10: #{categorical_forward_t.1} parent=0 // pred_check
    _
  $region11: #{categorical_forward_t.1} parent=0 // pred_check_branch
    %17 = sbr.rel (0) target = $region13
  $region12: #{categorical_forward_t.1} parent=0 // pred_region
    _
  $region13: #{categorical_forward_t.1} parent=0 // pred_fallthru
    _
  // Predicated region
  $region14: #{categorical_forward_t.1} parent=0 // pred_check
    _
  $region15: #{categorical_forward_t.1} parent=0 // pred_check_branch
    %19 = sbr.rel (0) target = $region17
  $region16: #{categorical_forward_t.1} parent=0 // pred_region
    _
  $region17: #{categorical_forward_t.1} parent=0 // pred_fallthru
    _
  %v21 = vld [vmem:[%s0] sm:$0xf]
  %v22 = vld [vmem:[%s0 + $0x4] sm:$0xf]
  %v23 = vld [vmem:[%s0 + $0x8] sm:$0xf]
  %v24 = vld [vmem:[%s0 + $0xc] sm:$0xf]
  %v25 = vld [vmem:[%s1] sm:$0xf]
  %v26 = vld [vmem:[%s1 + $0x4] sm:$0xf]
  %v27 = vld [vmem:[%s2] sm:$0xff]
  %v28 = vld [vmem:[%s2 + $0x8] sm:$0xff]
  %v29 = vld [vmem:[%s3] sm:$0x3]
  %v30 = vld [vmem:[%s3 + $0x2] sm:$0x3]
  %v31 = vunpack.c.0.s8 %v29
  %v32 = vunpack.c.0.s8 %v30
  %v33 = vcvt.s32.f32 %v31
  %v34 = vcvt.s32.f32 %v32
  %vm35 = vcmp.gt.f32.partialorder %v33, 0.0
  %vm36 = vcmp.gt.f32.partialorder %v34, 0.0
  %38 = vset.pattern.permute.xlu0 0
  %39 = vperm.xlu0 %38, %v27
  %v40 = vpop.permute.xlu0 %39
  %43 = vset.pattern.permute.xlu0 0
  %44 = vperm.xlu0 %43, %v28
  %v45 = vpop.permute.xlu0 %44
  %v49 = vunpack.c.l.b16 %v25
  %v50 = vunpack.c.l.b16 %v26
  %v51 = vpack.c.b16 %v50, %v49
  %v56 = vunpack.c.l.b16 %v21
  %v57 = vunpack.c.l.b16 %v22
  %v58 = vunpack.c.l.b16 %v23
  %v59 = vunpack.c.l.b16 %v24
  %v60 = vpack.c.b16 %v57, %v56
  %v61 = vpack.c.b16 %v59, %v58
  %vm64 = vcmask 261120
  %v66 = vsel %vm64, %v51, 0
  %68 = vmatprep.subr.bf16.mxu0 0
  %69 = vmatpush1.bf16.msra.mxu0 %v60
  %70 = vmatprep.subr.bf16.mxu0 0
  %71 = vmatpush1.bf16.msra.mxu0 %v61
  %72 = vmatprep.subr.bf16.mxu0 0
  %73 = vmatpush1.bf16.msra.mxu0 0
  %74 = vmatprep.subr.bf16.mxu0 0
  %75 = vmatpush1.bf16.msra.mxu0 0
  %76 = vmatprep.subr.bf16.mxu0 0
  %77 = vmatpush1.bf16.msra.mxu0 0
  %78 = vmatprep.subr.bf16.mxu0 0
  %79 = vmatpush1.bf16.msra.mxu0 0
  %80 = vmatprep.subr.bf16.mxu0 0
  %81 = vmatpush1.bf16.msra.mxu0 0
  %82 = vmatprep.subr.bf16.mxu0 0
  %83 = vmatpush1.bf16.msra.mxu0 0
  %84 = vmatprep.subr.bf16.mxu0 0
  %85 = vmatpush1.bf16.msra.mxu0 0
  %86 = vmatprep.subr.bf16.mxu0 0
  %87 = vmatpush1.bf16.msra.mxu0 0
  %88 = vmatprep.subr.bf16.mxu0 0
  %89 = vmatpush1.bf16.msra.mxu0 0
  %90 = vmatprep.subr.bf16.mxu0 0
  %91 = vmatpush1.bf16.msra.mxu0 0
  %92 = vmatprep.subr.bf16.mxu0 0
  %93 = vmatpush1.bf16.msra.mxu0 0
  %94 = vmatprep.subr.bf16.mxu0 0
  %95 = vmatpush1.bf16.msra.mxu0 0
  %96 = vmatprep.subr.bf16.mxu0 0
  %97 = vmatpush1.bf16.msra.mxu0 0
  %98 = vmatprep.subr.bf16.mxu0 0
  %99 = vmatpush1.bf16.msra.mxu0 0
  %100 = vmatprep.mubr.bf16.mxu0 0
  %101 = vmatmul.mubr.bf16.gmra.mrb[0].mxu0 %v66
  %v102 = vpop.f32.mrb[0].mxu0
  %v103 = vadd.f32 %v40, %v102
  %v104 = vpop.f32.mrb[0].mxu0
  %v105 = vpop.f32.mrb[0].mxu0
  %v106 = vadd.f32 %v45, %v105
  %v107 = vpop.f32.mrb[0].mxu0
  %108 = vdwg.mxu0
  %v109 = vmax.f32 %v103, %v106
  %v110 = vrot.slane %v109, 4
  %v111 = vmax.f32 %v109, %v110
  %v112 = vrot.slane %v111, 2
  %v113 = vmax.f32 %v111, %v112
  %v114 = vrot.slane %v113, 1
  %v115 = vmax.f32 %v113, %v114
  %v116 = vsub.f32 %v103, %v115
  %v117 = vsub.f32 %v106, %v115
  %v118 = vmul.f32 %v116, 1.442695
  %v119 = vpow.pop %v118
  %v120 = vmul.f32 %v117, 1.442695
  %v121 = vpow.pop %v120
  %v122 = vadd.f32 %v119, %v121
  %v123 = vrot.slane %v122, 4
  %v124 = vadd.f32 %v122, %v123
  %v125 = vrot.slane %v124, 2
  %v126 = vadd.f32 %v124, %v125
  %v127 = vrot.slane %v126, 1
  %v128 = vadd.f32 %v126, %v127
  %v129 = vsel %vm35, %v119, 0.0
  %v130 = vsel %vm36, %v121, 0.0
  %v131 = vsub.f32 %v119, %v129
  %v132 = vsub.f32 %v121, %v130
  %v133 = vrcp.pop %v128
  %v134 = vmul.f32 %v131, %v133
  %v135 = vmul.f32 %v132, %v133
  %v136 = vpack.c.bf16 %v135, %v134
  %v138 = vunpack.c.l.b16 %v136
  %v139 = vunpack.c.h.b16 %v136
  %v140 = vpack.c.b16 %v138, %v138
  %v141 = vpack.c.b16 %v139, %v139
  %144 = vst [vmem:[%s5] sm:$0xf] %v140
  %145 = vst [vmem:[%s5 + $0x4] sm:$0xf] %v141
  %v146 = vmul.f32 %v131, 8.315287e-07
  %v147 = vmul.f32 %v132, 8.315287e-07
  %v148 = vadd.f32 %v129, %v146
  %v149 = vadd.f32 %v130, %v147
  %v150 = vadd.f32 %v148, %v149
  %v151 = vrot.slane %v150, 4
  %v152 = vadd.f32 %v150, %v151
  %v153 = vrot.slane %v152, 2
  %v154 = vadd.f32 %v152, %v153
  %v155 = vrot.slane %v154, 1
  %v156 = vadd.f32 %v154, %v155
  %v157 = vrcp.pop %v156
  %v158 = vmul.f32 %v148, %v157
  %v159 = vmul.f32 %v149, %v157
  %v160 = vadd.f32 %v158, 1e-05
  %v161 = vadd.f32 %v159, 1e-05
  %v162 = vadd.f32 %v160, %v161
  %v163 = vrot.slane %v162, 4
  %v164 = vadd.f32 %v162, %v163
  %v165 = vrot.slane %v164, 2
  %v166 = vadd.f32 %v164, %v165
  %v167 = vrot.slane %v166, 1
  %v168 = vadd.f32 %v166, %v167
  %v169 = vrcp.pop %v168
  %v170 = vmul.f32 %v160, %v169
  %v171 = vmul.f32 %v161, %v169
  %172 = vst [vmem:[%s4] sm:$0xff] %v170
  %173 = vst [vmem:[%s4 + $0x8] sm:$0xff] %v171
  %v174 = vadd.f32 %v129, %v130
  %v175 = vrot.slane %v174, 4
  %v176 = vadd.f32 %v174, %v175
  %v177 = vrot.slane %v176, 2
  %v178 = vadd.f32 %v176, %v177
  %v179 = vrot.slane %v178, 1
  %v180 = vadd.f32 %v178, %v179
  %v181 = vrcp.pop %v180
  %v182 = vmul.f32 %v129, %v181
  %v183 = vmul.f32 %v130, %v181
  %v184 = vadd.f32 %v182, 1e-12
  %v185 = vadd.f32 %v183, 1e-12
  %v186 = vlog2.pop %v180
  %v187 = vmul.f32 %v186, 0.6931472
  %v188 = vsub.f32 %v116, %v187
  %v189 = vsub.f32 %v117, %v187
  %v190 = vmul.f32 %v184, %v188
  %v191 = vmul.f32 %v185, %v189
  %v192 = vsub.f32 0.0, %v190
  %v193 = vsub.f32 0.0, %v191
  %v194 = vsel %vm35, %v192, 0.0
  %v195 = vsel %vm36, %v193, 0.0
  %v196 = vpack.c.bf16 %v195, %v194
  %v198 = vunpack.c.l.b16 %v196
  %v199 = vunpack.c.h.b16 %v196
  %v200 = vpack.c.b16 %v198, %v198
  %v201 = vpack.c.b16 %v199, %v199
  %204 = vst [vmem:[%s6] sm:$0xf] %v200
  %205 = vst [vmem:[%s6 + $0x4] sm:$0xf] %v201
  // Predicated region
  $region18: #{categorical_forward_t.1} parent=0 // pred_check
    _
  $region19: #{categorical_forward_t.1} parent=0 // pred_check_branch
    %207 = sbr.rel (0) target = $region21
  $region20: #{categorical_forward_t.1} parent=0 // pred_region
    _
  $region21: #{categorical_forward_t.1} parent=0 // pred_fallthru
    _
  // Predicated region
  $region22: #{categorical_forward_t.1} parent=0 // pred_check
    _
  $region23: #{categorical_forward_t.1} parent=0 // pred_check_branch
    %209 = sbr.rel (0) target = $region25
  $region24: #{categorical_forward_t.1} parent=0 // pred_region
    _
  $region25: #{categorical_forward_t.1} parent=0 // pred_fallthru
    _
  // Predicated region
  $region26: #{categorical_forward_t.1} parent=0 // pred_check
    _
  $region27: #{categorical_forward_t.1} parent=0 // pred_check_branch
    %211 = sbr.rel (0) target = $region29
  $region28: #{categorical_forward_t.1} parent=0 // pred_region
    _
  $region29: #{categorical_forward_t.1} parent=0 // pred_fallthru
    _
  // Predicated region
  $region30: #{categorical_forward_t.1} parent=0 // pred_check
    _
  $region31: #{categorical_forward_t.1} parent=0 // pred_check_branch
    %213 = sbr.rel (0) target = $region33
  $region32: #{categorical_forward_t.1} parent=0 // pred_region
    _
  $region33: #{categorical_forward_t.1} parent=0 // pred_fallthru
    _
  // Predicated region
  $region34: #{categorical_forward_t.1} parent=0 // pred_check
    _
  $region35: #{categorical_forward_t.1} parent=0 // pred_check_branch
    %215 = sbr.rel (0) target = $region37
  $region36: #{categorical_forward_t.1} parent=0 // pred_region
    _
  $region37: #{categorical_forward_t.1} parent=0 // pred_fallthru
    _
  // Predicated region
  $region38: #{categorical_forward_t.1} parent=0 // pred_check
    _
  $region39: #{categorical_forward_t.1} parent=0 // pred_check_branch
    %217 = sbr.rel (0) target = $region41
  $region40: #{categorical_forward_t.1} parent=0 // pred_region
    _
  $region41: #{categorical_forward_t.1} parent=0 // pred_fallthru
    _

</llo_original>
